<compile_context>
chip_gen: v7x
topology: tpu7x:2x2x1
jax: 0.10.0
libtpu: 0.0.40
codegen_flags: <defaults>
</compile_context>

<pallas_src>
import jax
import jax.numpy as jnp
from jax import lax
from jax.experimental import pallas as pl
from jax.experimental.pallas import tpu as pltpu


def _make_loss_kernel(regression_weight: float, classification_weight: float,
                      batch_size: int):
    rw = float(regression_weight)
    cw = float(classification_weight)

    def kernel(gt_ref, pred_ref, logit_ref, out_ref):
        # gt_ref   : [2, TB, T]      (x/y split, T on lanes)
        # pred_ref : [2, TB, N, T]
        # logit_ref: [TB, N]
        # out_ref  : [1, 8, 128]     per-block partial sum (scalar broadcast)
        gt_x = gt_ref[0].astype(jnp.float32)        # [TB, T]
        gt_y = gt_ref[1].astype(jnp.float32)
        pred_x = pred_ref[0].astype(jnp.float32)    # [TB, N, T]
        pred_y = pred_ref[1].astype(jnp.float32)
        logit = logit_ref[...].astype(jnp.float32)  # [TB, N]

        TB, N, T = pred_x.shape

        # Fused squared-difference + sum over state dim (x/y split, no S-reduce).
        dx = pred_x - gt_x[:, None, :]
        dy = pred_y - gt_y[:, None, :]
        dist = jnp.sqrt(dx * dx + dy * dy)                        # [TB, N, T]

        # Mean L2 distance over timestamps (lane reduce over T).
        mean_traj_distance = jnp.sum(dist, axis=2) * (1.0 / T)    # [TB, N]

        # Min (regression) and first-occurrence argmin over trajectories.
        min_dist = jnp.min(mean_traj_distance, axis=1, keepdims=True)     # [TB, 1]
        traj_iota = lax.broadcasted_iota(jnp.int32, (TB, N), 1)
        min_idx = jnp.min(
            jnp.where(mean_traj_distance == min_dist, traj_iota, N),
            axis=1, keepdims=True)                                        # [TB, 1]

        # Cross-entropy(traj_logit, min_idx) — EUP/XLU filler under the DMAs.
        one_hot = (traj_iota == min_idx).astype(jnp.float32)              # [TB, N]
        sel_logit = jnp.sum(logit * one_hot, axis=1, keepdims=True)       # [TB, 1]
        max_logit = jnp.max(logit, axis=1, keepdims=True)                 # [TB, 1]
        lse = jnp.log(jnp.sum(jnp.exp(logit - max_logit), axis=1,
                              keepdims=True)) + max_logit                 # [TB, 1]
        ce = lse - sel_logit                                              # [TB, 1]

        per_row = rw * min_dist + cw * ce                                 # [TB, 1]

        # Mask batch-padding rows (global row id >= true batch size).
        row_ids = (pl.program_id(0) * TB
                   + lax.broadcasted_iota(jnp.int32, (TB, 1), 0))
        per_row = jnp.where(row_ids < batch_size, per_row, 0.0)

        partial = jnp.sum(per_row)              # sum over this batch tile
        out_ref[...] = partial * jnp.ones((1, 8, 128), jnp.float32)

    return kernel


def combined_regression_classification_loss(gt, pred, traj_logit,
                                             regression_weight=1.0,
                                             classification_weight=1.0):
    """gt: [B,T,2], pred: [B,N,T,2], traj_logit: [B,N] -> scalar f32 loss."""
    B, T, S = gt.shape
    _, N, _, _ = pred.shape
    assert S == 2 and pred.shape == (B, N, T, S) and traj_logit.shape == (B, N)

    # ---- Layout plumbing (wrapper side): split x/y so T is the lane dim.
    pred_t = jnp.moveaxis(pred, 3, 0)   # [2, B, N, T]
    gt_t = jnp.moveaxis(gt, 2, 0)       # [2, B, T]

    # ---- Batch tile size: multiple of 8, <=128, double-buffered pred tile
    #      stays well under the 32 MiB default scoped VMEM (v7x-safe).
    itemsize = pred.dtype.itemsize
    t_pad = ((T + 127) // 128) * 128
    n_pad = ((N + 7) // 8) * 8
    row_bytes = 2 * n_pad * t_pad * itemsize            # per batch row, padded
    budget = 4 * 1024 * 1024                            # per pred tile
    tb = max(8, min(128, (budget // max(row_bytes, 1)) // 8 * 8))
    tb = min(tb, ((B + 7) // 8) * 8)
    b_pad = ((B + tb - 1) // tb) * tb
    grid = (b_pad // tb,)

    if b_pad != B:
        pad = b_pad - B
        pred_t = jnp.pad(pred_t, ((0, 0), (0, pad), (0, 0), (0, 0)))
        gt_t = jnp.pad(gt_t, ((0, 0), (0, pad), (0, 0)))
        traj_logit = jnp.pad(traj_logit, ((0, pad), (0, 0)))

    kernel = _make_loss_kernel(regression_weight, classification_weight, B)

    cost = pl.CostEstimate(
        flops=int(8 * b_pad * N * T + 8 * b_pad * N),
        transcendentals=int(b_pad * N * T + 2 * b_pad * N),
        bytes_accessed=int(pred_t.size * pred_t.dtype.itemsize
                           + gt_t.size * gt_t.dtype.itemsize
                           + traj_logit.size * traj_logit.dtype.itemsize
                           + grid[0] * 8 * 128 * 4),
    )

    partials = pl.pallas_call(
        kernel,
        out_shape=jax.ShapeDtypeStruct((grid[0], 8, 128), jnp.float32),
        grid=grid,
        in_specs=[
            pl.BlockSpec((2, tb, T), lambda i: (0, i, 0)),         # gt  [2,B,T]
            pl.BlockSpec((2, tb, N, T), lambda i: (0, i, 0, 0)),   # pred[2,B,N,T]
            pl.BlockSpec((tb, N), lambda i: (i, 0)),               # logit [B,N]
        ],
        out_specs=pl.BlockSpec((1, 8, 128), lambda i: (i, 0, 0)),
        compiler_params=pltpu.CompilerParams(
            dimension_semantics=("parallel",)),
        cost_estimate=cost,
    )(gt_t, pred_t, traj_logit)

    # Tiny final reduce: sum of per-row losses / B == rw*mean(min) + cw*mean(CE).
    return jnp.sum(partials[:, 0, 0]) / B


def _reference_loss(gt, pred, traj_logit, rw=1.0, cw=1.0):
    diff = pred - gt[:, None, :, :]
    dist = jnp.sqrt(jnp.sum(diff * diff, axis=3))
    mean_d = jnp.mean(dist, axis=2)
    reg = jnp.mean(jnp.min(mean_d, axis=1))
    idx = jnp.argmin(mean_d, axis=1)
    lse = jax.nn.logsumexp(traj_logit, axis=1)
    sel = jnp.take_along_axis(traj_logit, idx[:, None], axis=1)[:, 0]
    ce = jnp.mean(lse - sel)
    return rw * reg + cw * ce


if __name__ == "__main__":
    key = jax.random.PRNGKey(0)
    k_gt, k_pred, k_logit = jax.random.split(key, 3)

    B, N, T, S = 2, 4, 8, 2
    gt = jax.random.normal(k_gt, (B, T, S), dtype=jnp.float32)
    pred = jax.random.normal(k_pred, (B, N, T, S), dtype=jnp.float32)
    traj_logit = jax.random.normal(k_logit, (B, N), dtype=jnp.float32)

    loss = combined_regression_classification_loss(
        gt, pred, traj_logit, regression_weight=1.0, classification_weight=1.0)
    loss = jax.block_until_ready(loss)

    ref = jax.block_until_ready(_reference_loss(gt, pred, traj_logit, 1.0, 1.0))
    assert abs(float(loss) - float(ref)) < 1e-4, (float(loss), float(ref))
    print("KERNEL_OK")
</pallas_src>

<mosaic_0001>
module attributes {stable_mosaic.version = 11 : i64} {
  func.func @kernel(%arg0: i32, %arg1: memref<2x8x8xf32, #tpu.memory_space<vmem>>, %arg2: memref<2x8x4x8xf32, #tpu.memory_space<vmem>>, %arg3: memref<8x4xf32, #tpu.memory_space<vmem>>, %arg4: memref<1x8x128xf32, #tpu.memory_space<vmem>>) attributes {dimension_semantics = [#tpu.dimension_semantics<parallel>], iteration_bounds = array<i64: 1>, scalar_prefetch = 0 : i64, scratch_operands = 0 : i64, tpu.core_type = #tpu.core_type<tc>, window_params = [{transform_indices = @transform_0, window_bounds = array<i64: 2, 8, 8>}, {transform_indices = @transform_1, window_bounds = array<i64: 2, 8, 4, 8>}, {transform_indices = @transform_2, window_bounds = array<i64: 8, 4>}, {transform_indices = @transform_3, window_bounds = array<i64: 1, 8, 128>}]} {
    %c0 = arith.constant 0 : index
    %c0_0 = arith.constant 0 : index
    %c0_1 = arith.constant 0 : index
    %0 = vector.load %arg1[%c0, %c0_0, %c0_1] : memref<2x8x8xf32, #tpu.memory_space<vmem>>, vector<1x8x8xf32>
    %1 = vector.shape_cast %0 : vector<1x8x8xf32> to vector<8x8xf32>
    %c1 = arith.constant 1 : index
    %c0_2 = arith.constant 0 : index
    %c0_3 = arith.constant 0 : index
    %2 = vector.load %arg1[%c1, %c0_2, %c0_3] : memref<2x8x8xf32, #tpu.memory_space<vmem>>, vector<1x8x8xf32>
    %3 = vector.shape_cast %2 : vector<1x8x8xf32> to vector<8x8xf32>
    %c0_4 = arith.constant 0 : index
    %c0_5 = arith.constant 0 : index
    %c0_6 = arith.constant 0 : index
    %c0_7 = arith.constant 0 : index
    %4 = vector.load %arg2[%c0_4, %c0_5, %c0_6, %c0_7] : memref<2x8x4x8xf32, #tpu.memory_space<vmem>>, vector<1x8x4x8xf32>
    %5 = vector.shape_cast %4 : vector<1x8x4x8xf32> to vector<8x4x8xf32>
    %c1_8 = arith.constant 1 : index
    %c0_9 = arith.constant 0 : index
    %c0_10 = arith.constant 0 : index
    %c0_11 = arith.constant 0 : index
    %6 = vector.load %arg2[%c1_8, %c0_9, %c0_10, %c0_11] : memref<2x8x4x8xf32, #tpu.memory_space<vmem>>, vector<1x8x4x8xf32>
    %7 = vector.shape_cast %6 : vector<1x8x4x8xf32> to vector<8x4x8xf32>
    %c0_12 = arith.constant 0 : index
    %c0_13 = arith.constant 0 : index
    %8 = vector.load %arg3[%c0_12, %c0_13] : memref<8x4xf32, #tpu.memory_space<vmem>>, vector<8x4xf32>
    %9 = vector.shape_cast %1 : vector<8x8xf32> to vector<8x1x8xf32>
    %10 = vector.broadcast %9 : vector<8x1x8xf32> to vector<8x4x8xf32>
    %11 = arith.subf %5, %10 : vector<8x4x8xf32>
    %12 = vector.shape_cast %3 : vector<8x8xf32> to vector<8x1x8xf32>
    %13 = vector.broadcast %12 : vector<8x1x8xf32> to vector<8x4x8xf32>
    %14 = arith.subf %7, %13 : vector<8x4x8xf32>
    %15 = arith.mulf %11, %11 : vector<8x4x8xf32>
    %16 = arith.mulf %14, %14 : vector<8x4x8xf32>
    %17 = arith.addf %15, %16 : vector<8x4x8xf32>
    %18 = math.sqrt %17 : vector<8x4x8xf32>
    %cst = arith.constant dense<0.000000e+00> : vector<8x4xf32>
    %19 = vector.multi_reduction <add>, %18, %cst [2] : vector<8x4x8xf32> to vector<8x4xf32>
    %cst_14 = arith.constant 1.250000e-01 : f32
    %20 = vector.broadcast %cst_14 : f32 to vector<8x4xf32>
    %21 = arith.mulf %19, %20 : vector<8x4xf32>
    %cst_15 = arith.constant dense<0x7F800000> : vector<8xf32>
    %22 = vector.multi_reduction <minimumf>, %21, %cst_15 [1] : vector<8x4xf32> to vector<8xf32>
    %23 = vector.shape_cast %22 : vector<8xf32> to vector<8x1xf32>
    %24 = tpu.iota {dimensions = array<i32: 1>} : vector<8x4xi32>
    %25 = vector.broadcast %23 : vector<8x1xf32> to vector<8x4xf32>
    %26 = arith.cmpf oeq, %21, %25 : vector<8x4xf32>
    %c4_i32 = arith.constant 4 : i32
    %27 = vector.broadcast %c4_i32 : i32 to vector<8x4xi32>
    %28 = arith.select %26, %24, %27 : vector<8x4xi1>, vector<8x4xi32>
    %cst_16 = arith.constant dense<2147483647> : vector<8xi32>
    %29 = vector.multi_reduction <minsi>, %28, %cst_16 [1] : vector<8x4xi32> to vector<8xi32>
    %30 = vector.shape_cast %29 : vector<8xi32> to vector<8x1xi32>
    %31 = vector.broadcast %30 : vector<8x1xi32> to vector<8x4xi32>
    %32 = arith.cmpi eq, %24, %31 : vector<8x4xi32>
    %33 = arith.extui %32 : vector<8x4xi1> to vector<8x4xi32>
    %34 = arith.sitofp %33 : vector<8x4xi32> to vector<8x4xf32>
    %35 = arith.mulf %8, %34 : vector<8x4xf32>
    %cst_17 = arith.constant dense<0.000000e+00> : vector<8xf32>
    %36 = vector.multi_reduction <add>, %35, %cst_17 [1] : vector<8x4xf32> to vector<8xf32>
    %37 = vector.shape_cast %36 : vector<8xf32> to vector<8x1xf32>
    %cst_18 = arith.constant dense<0xFF800000> : vector<8xf32>
    %38 = vector.multi_reduction <maximumf>, %8, %cst_18 [1] : vector<8x4xf32> to vector<8xf32>
    %39 = vector.shape_cast %38 : vector<8xf32> to vector<8x1xf32>
    %40 = vector.broadcast %39 : vector<8x1xf32> to vector<8x4xf32>
    %41 = arith.subf %8, %40 : vector<8x4xf32>
    %42 = math.exp %41 : vector<8x4xf32>
    %cst_19 = arith.constant dense<0.000000e+00> : vector<8xf32>
    %43 = vector.multi_reduction <add>, %42, %cst_19 [1] : vector<8x4xf32> to vector<8xf32>
    %44 = vector.shape_cast %43 : vector<8xf32> to vector<8x1xf32>
    %45 = math.log %44 : vector<8x1xf32>
    %46 = arith.addf %45, %39 : vector<8x1xf32>
    %47 = arith.subf %46, %37 : vector<8x1xf32>
    %cst_20 = arith.constant 1.000000e+00 : f32
    %48 = vector.broadcast %cst_20 : f32 to vector<8x1xf32>
    %49 = arith.mulf %48, %23 : vector<8x1xf32>
    %cst_21 = arith.constant 1.000000e+00 : f32
    %50 = vector.broadcast %cst_21 : f32 to vector<8x1xf32>
    %51 = arith.mulf %50, %47 : vector<8x1xf32>
    %52 = arith.addf %49, %51 : vector<8x1xf32>
    %c8_i32 = arith.constant 8 : i32
    %53 = arith.muli %arg0, %c8_i32 : i32
    %54 = tpu.iota {dimensions = array<i32: 0>} : vector<8x1xi32>
    %55 = vector.broadcast %53 : i32 to vector<8x1xi32>
    %56 = arith.addi %55, %54 : vector<8x1xi32>
    %c2_i32 = arith.constant 2 : i32
    %57 = vector.broadcast %c2_i32 : i32 to vector<8x1xi32>
    %58 = arith.cmpi slt, %56, %57 : vector<8x1xi32>
    %cst_22 = arith.constant 0.000000e+00 : f32
    %59 = vector.broadcast %cst_22 : f32 to vector<8x1xf32>
    %60 = arith.select %58, %52, %59 : vector<8x1xi1>, vector<8x1xf32>
    %61 = vector.shape_cast %60 : vector<8x1xf32> to vector<1x8x1xf32>
    %cst_23 = arith.constant dense<0.000000e+00> : vector<1xf32>
    %62 = vector.multi_reduction <add>, %61, %cst_23 [1, 2] : vector<1x8x1xf32> to vector<1xf32>
    %63 = vector.shape_cast %62 : vector<1xf32> to vector<1x1x1xf32>
    %64 = vector.extract %63[0, 0, 0] : f32 from vector<1x1x1xf32>
    %cst_24 = arith.constant 1.000000e+00 : f32
    %65 = vector.broadcast %cst_24 : f32 to vector<1x8x128xf32>
    %66 = vector.broadcast %64 : f32 to vector<1x8x128xf32>
    %67 = arith.mulf %66, %65 : vector<1x8x128xf32>
    %c0_25 = arith.constant 0 : index
    %c0_26 = arith.constant 0 : index
    %c0_27 = arith.constant 0 : index
    %68 = vector.load %arg4[%c0_25, %c0_26, %c0_27] : memref<1x8x128xf32, #tpu.memory_space<vmem>>, vector<1x8x128xf32>
    tpu.vector_store %arg4[%c0_25, %c0_26, %c0_27], %67 {strides = array<i32>} : memref<1x8x128xf32, #tpu.memory_space<vmem>>, vector<1x8x128xf32>,
    return
  }
  func.func @transform_0(%arg0: i32) -> (i32, i32, i32) {
    %c0_i32 = arith.constant 0 : i32
    %c0_i32_0 = arith.constant 0 : i32
    %c0_i32_1 = arith.constant 0 : i32
    return %c0_i32, %arg0, %c0_i32_0 : i32, i32, i32
  }
  func.func @transform_1(%arg0: i32) -> (i32, i32, i32, i32) {
    %c0_i32 = arith.constant 0 : i32
    %c0_i32_0 = arith.constant 0 : i32
    %c0_i32_1 = arith.constant 0 : i32
    %c0_i32_2 = arith.constant 0 : i32
    return %c0_i32, %arg0, %c0_i32_0, %c0_i32_1 : i32, i32, i32, i32
  }
  func.func @transform_2(%arg0: i32) -> (i32, i32) {
    %c0_i32 = arith.constant 0 : i32
    %c0_i32_0 = arith.constant 0 : i32
    return %arg0, %c0_i32 : i32, i32
  }
  func.func @transform_3(%arg0: i32) -> (i32, i32, i32) {
    %c0_i32 = arith.constant 0 : i32
    %c0_i32_0 = arith.constant 0 : i32
    %c0_i32_1 = arith.constant 0 : i32
    return %arg0, %c0_i32, %c0_i32_0 : i32, i32, i32
  }
}

</mosaic_0001>

<llo_original>
// kernel: tpu_custom_call.1
$region0: #{tpu_custom_call.1}
  #allocation0 [shape = 'u32[]', space=smem, size = 0x4, offset = 0x4, fixed_abs, tag = 'smem constant byte address 0x4 - core index']
  #allocation1 [shape = 'u32[144,128]{1,0:T(1,128)}', space=vmem, size = 0x12000, scoped, tag = 'internal scratch']
  %s0 = inlined_call_operand.hbm [shape: f32[2,8,8], index: 0, kind: input, shape index: {}]
  %s1 = inlined_call_operand.hbm [shape: f32[2,8,4,8], index: 1, kind: input, shape index: {}]
  %s2 = inlined_call_operand.vmem [shape: f32[8,4], index: 2, kind: input, shape index: {}]
  %s3 = inlined_call_operand.hbm [shape: f32[1,8,128], index: 3, kind: output, shape index: {}]
  %s4 = sld [smem:[#allocation0]]
  $region30: #{tpu_custom_call.1} parent=0
    _
  %s6 = ssub.s32 1, %s4
  %s7 = scalar_select 0, %s6, %s4
  $region1: #{tpu_custom_call.1} parent=0
    #allocation2 [shape = 'u8[8192]{0}', space=vmem, size = 0x2000, scoped, tag = 'input window, operand 0, single buffered']
    #allocation3 [shape = 's32[1]{0}', space=sflag, size = 0x4, scoped, tag = 'scoped memory for tpu_custom_call.1']
    #allocation4 [shape = 's32[1]{0}', space=sflag, size = 0x4, scoped, tag = 'scoped memory for tpu_custom_call.1']
    #allocation5 [shape = 'u8[32768]{0}', space=vmem, size = 0x8000, scoped, tag = 'input window, operand 1, single buffered']
    #allocation6 [shape = 's32[1]{0}', space=sflag, size = 0x4, scoped, tag = 'scoped memory for tpu_custom_call.1']
    #allocation7 [shape = 'u8[4096]{0}', space=vmem, size = 0x1000, scoped, tag = 'output window, operand 0, single buffered']
    %8 = vsyncpa [#allocation3], 0
    %9 = vsyncpa [#allocation6], 0
    %10 = vsyncpa [#allocation4], 0
    // Predicated region
    $region2: #{tpu_custom_call.1} parent=1 // pred_check
      _
    $region3: #{tpu_custom_call.1} parent=1 // pred_check_branch
      %12 = sbr.rel (0) target = $region5
    $region4: #{tpu_custom_call.1} parent=1 // pred_region
      %s14 = ssub.s32 256, 256
      %15 = vsyncadd [#allocation3], %s14
      %s16 = sshll.u32 [#allocation2], 4
      %s17 = int_to_ptr.vmem [resolvable:$true] %s16
      %22 = dma.hbm_to_vmem [thread:$0]  %s0, 256, %s17, [#allocation3], 128, 128, 8
    $region5: #{tpu_custom_call.1} parent=1 // pred_fallthru
      _
    // Predicated region
    $region6: #{tpu_custom_call.1} parent=1 // pred_check
      _
    $region7: #{tpu_custom_call.1} parent=1 // pred_check_branch
      %24 = sbr.rel (0) target = $region9
    $region8: #{tpu_custom_call.1} parent=1 // pred_region
      %s26 = ssub.s32 1024, 1024
      %27 = vsyncadd [#allocation6], %s26
      %s28 = sshll.u32 [#allocation5], 4
      %s29 = int_to_ptr.vmem [resolvable:$true] %s28
      %34 = dma.hbm_to_vmem [thread:$0]  %s1, 1024, %s29, [#allocation6], 64, 64, 4
    $region9: #{tpu_custom_call.1} parent=1 // pred_fallthru
      _
    // Predicated region
    $region10: #{tpu_custom_call.1} parent=1 // pred_check
      _
    $region11: #{tpu_custom_call.1} parent=1 // pred_check_branch
      %36 = sbr.rel (0) target = $region13
    $region12: #{tpu_custom_call.1} parent=1 // pred_region
      _
    $region13: #{tpu_custom_call.1} parent=1 // pred_fallthru
      _
    // Predicated region
    $region14: #{tpu_custom_call.1} parent=1 // pred_check
      _
    $region15: #{tpu_custom_call.1} parent=1 // pred_check_branch
      %38 = sbr.rel (0) target = $region17
    $region16: #{tpu_custom_call.1} parent=1 // pred_region
      %39 = dma.done [#allocation3], 256
    $region17: #{tpu_custom_call.1} parent=1 // pred_fallthru
      _
    // Predicated region
    $region18: #{tpu_custom_call.1} parent=1 // pred_check
      _
    $region19: #{tpu_custom_call.1} parent=1 // pred_check_branch
      %41 = sbr.rel (0) target = $region21
    $region20: #{tpu_custom_call.1} parent=1 // pred_region
      %42 = dma.done [#allocation6], 1024
    $region21: #{tpu_custom_call.1} parent=1 // pred_fallthru
      _
    %v43 = vld [vmem:[#allocation2] sm:$0xff]
    %s44 = scalar_lea.vmem [#allocation2], 8
    %v45 = vld [vmem:[%s44] sm:$0xff]
    %v46 = vld [vmem:[#allocation5] sm:$0xf]
    %v47 = vld [vmem:[#allocation5 + $0x4] sm:$0xf]
    %v48 = vld [vmem:[#allocation5 + $0x8] sm:$0xf]
    %v49 = vld [vmem:[#allocation5 + $0xc] sm:$0xf]
    %v50 = vld [vmem:[#allocation5 + $0x10] sm:$0xf]
    %v51 = vld [vmem:[#allocation5 + $0x14] sm:$0xf]
    %v52 = vld [vmem:[#allocation5 + $0x18] sm:$0xf]
    %v53 = vld [vmem:[#allocation5 + $0x1c] sm:$0xf]
    %s54 = scalar_lea.vmem [#allocation5], 32
    %v55 = vld [vmem:[%s54] sm:$0xf]
    %v56 = vld [vmem:[%s54 + $0x4] sm:$0xf]
    %v57 = vld [vmem:[%s54 + $0x8] sm:$0xf]
    %v58 = vld [vmem:[%s54 + $0xc] sm:$0xf]
    %v59 = vld [vmem:[%s54 + $0x10] sm:$0xf]
    %v60 = vld [vmem:[%s54 + $0x14] sm:$0xf]
    %v61 = vld [vmem:[%s54 + $0x18] sm:$0xf]
    %v62 = vld [vmem:[%s54 + $0x1c] sm:$0xf]
    %v63 = vld [vmem:[%s2] sm:$0xff]
    %v65 = vcombine.high %v43, %v43
    %v67 = vunpack.c.l.s4 1966171168
    %v68 = vunpack.c.0.s8 %v67
    %v69 = vlaneseq
    %v70 = vshrl.u32 %v69, 7
    %v71 = vsub.s32 %v68, %v70
    %v72 = vrot.slane %v43, %v71
    %v74 = vunpack.c.l.s4 1966171168
    %v75 = vunpack.c.0.s8 %v74
    %v76 = vlaneseq
    %v77 = vshrl.u32 %v76, 7
    %v78 = vsub.s32 %v75, %v77
    %v79 = vrot.slane %v65, %v78
    %v80 = vcombine.high %v72, %v72
    %v81 = vcombine.high %v79, %v79
    %v83 = vunpack.c.l.s4 1966171168
    %v84 = vunpack.c.0.s8 %v83
    %v85 = vlaneseq
    %v86 = vshrl.u32 %v85, 7
    %v87 = vsub.s32 %v84, %v86
    %v88 = vrot.slane %v72, %v87
    %v90 = vunpack.c.l.s4 1966171168
    %v91 = vunpack.c.0.s8 %v90
    %v92 = vlaneseq
    %v93 = vshrl.u32 %v92, 7
    %v94 = vsub.s32 %v91, %v93
    %v95 = vrot.slane %v79, %v94
    %v97 = vunpack.c.l.s4 1966171168
    %v98 = vunpack.c.0.s8 %v97
    %v99 = vlaneseq
    %v100 = vshrl.u32 %v99, 7
    %v101 = vsub.s32 %v98, %v100
    %v102 = vrot.slane %v80, %v101
    %v104 = vunpack.c.l.s4 1966171168
    %v105 = vunpack.c.0.s8 %v104
    %v106 = vlaneseq
    %v107 = vshrl.u32 %v106, 7
    %v108 = vsub.s32 %v105, %v107
    %v109 = vrot.slane %v81, %v108
    %v110 = vcombine.high %v88, %v88
    %v111 = vcombine.high %v95, %v95
    %v112 = vcombine.high %v102, %v102
    %v113 = vcombine.high %v109, %v109
    %v114 = vlaneseq
    %v115 = vshrl.u32 %v114, 7
    %v116 = vsub.s32 0, %v115
    %v117 = vrot.slane %v88, %v116
    %v118 = vlaneseq
    %v119 = vshrl.u32 %v118, 7
    %v120 = vsub.s32 0, %v119
    %v121 = vrot.slane %v102, %v120
    %v122 = vlaneseq
    %v123 = vshrl.u32 %v122, 7
    %v124 = vsub.s32 0, %v123
    %v125 = vrot.slane %v110, %v124
    %v126 = vlaneseq
    %v127 = vshrl.u32 %v126, 7
    %v128 = vsub.s32 0, %v127
    %v129 = vrot.slane %v112, %v128
    %v130 = vlaneseq
    %v131 = vshrl.u32 %v130, 7
    %v132 = vsub.s32 0, %v131
    %v133 = vrot.slane %v95, %v132
    %v134 = vlaneseq
    %v135 = vshrl.u32 %v134, 7
    %v136 = vsub.s32 0, %v135
    %v137 = vrot.slane %v109, %v136
    %v138 = vlaneseq
    %v139 = vshrl.u32 %v138, 7
    %v140 = vsub.s32 0, %v139
    %v141 = vrot.slane %v111, %v140
    %v142 = vlaneseq
    %v143 = vshrl.u32 %v142, 7
    %v144 = vsub.s32 0, %v143
    %v145 = vrot.slane %v113, %v144
    %v154 = vsub.f32 %v46, %v117
    %v155 = vsub.f32 %v47, %v121
    %v156 = vsub.f32 %v48, %v125
    %v157 = vsub.f32 %v49, %v129
    %v158 = vsub.f32 %v50, %v133
    %v159 = vsub.f32 %v51, %v137
    %v160 = vsub.f32 %v52, %v141
    %v161 = vsub.f32 %v53, %v145
    %v163 = vcombine.high %v45, %v45
    %v165 = vunpack.c.l.s4 1966171168
    %v166 = vunpack.c.0.s8 %v165
    %v167 = vlaneseq
    %v168 = vshrl.u32 %v167, 7
    %v169 = vsub.s32 %v166, %v168
    %v170 = vrot.slane %v45, %v169
    %v172 = vunpack.c.l.s4 1966171168
    %v173 = vunpack.c.0.s8 %v172
    %v174 = vlaneseq
    %v175 = vshrl.u32 %v174, 7
    %v176 = vsub.s32 %v173, %v175
    %v177 = vrot.slane %v163, %v176
    %v178 = vcombine.high %v170, %v170
    %v179 = vcombine.high %v177, %v177
    %v181 = vunpack.c.l.s4 1966171168
    %v182 = vunpack.c.0.s8 %v181
    %v183 = vlaneseq
    %v184 = vshrl.u32 %v183, 7
    %v185 = vsub.s32 %v182, %v184
    %v186 = vrot.slane %v170, %v185
    %v188 = vunpack.c.l.s4 1966171168
    %v189 = vunpack.c.0.s8 %v188
    %v190 = vlaneseq
    %v191 = vshrl.u32 %v190, 7
    %v192 = vsub.s32 %v189, %v191
    %v193 = vrot.slane %v177, %v192
    %v195 = vunpack.c.l.s4 1966171168
    %v196 = vunpack.c.0.s8 %v195
    %v197 = vlaneseq
    %v198 = vshrl.u32 %v197, 7
    %v199 = vsub.s32 %v196, %v198
    %v200 = vrot.slane %v178, %v199
    %v202 = vunpack.c.l.s4 1966171168
    %v203 = vunpack.c.0.s8 %v202
    %v204 = vlaneseq
    %v205 = vshrl.u32 %v204, 7
    %v206 = vsub.s32 %v203, %v205
    %v207 = vrot.slane %v179, %v206
    %v208 = vcombine.high %v186, %v186
    %v209 = vcombine.high %v193, %v193
    %v210 = vcombine.high %v200, %v200
    %v211 = vcombine.high %v207, %v207
    %v212 = vlaneseq
    %v213 = vshrl.u32 %v212, 7
    %v214 = vsub.s32 0, %v213
    %v215 = vrot.slane %v186, %v214
    %v216 = vlaneseq
    %v217 = vshrl.u32 %v216, 7
    %v218 = vsub.s32 0, %v217
    %v219 = vrot.slane %v200, %v218
    %v220 = vlaneseq
    %v221 = vshrl.u32 %v220, 7
    %v222 = vsub.s32 0, %v221
    %v223 = vrot.slane %v208, %v222
    %v224 = vlaneseq
    %v225 = vshrl.u32 %v224, 7
    %v226 = vsub.s32 0, %v225
    %v227 = vrot.slane %v210, %v226
    %v228 = vlaneseq
    %v229 = vshrl.u32 %v228, 7
    %v230 = vsub.s32 0, %v229
    %v231 = vrot.slane %v193, %v230
    %v232 = vlaneseq
    %v233 = vshrl.u32 %v232, 7
    %v234 = vsub.s32 0, %v233
    %v235 = vrot.slane %v207, %v234
    %v236 = vlaneseq
    %v237 = vshrl.u32 %v236, 7
    %v238 = vsub.s32 0, %v237
    %v239 = vrot.slane %v209, %v238
    %v240 = vlaneseq
    %v241 = vshrl.u32 %v240, 7
    %v242 = vsub.s32 0, %v241
    %v243 = vrot.slane %v211, %v242
    %v252 = vsub.f32 %v55, %v215
    %v253 = vsub.f32 %v56, %v219
    %v254 = vsub.f32 %v57, %v223
    %v255 = vsub.f32 %v58, %v227
    %v256 = vsub.f32 %v59, %v231
    %v257 = vsub.f32 %v60, %v235
    %v258 = vsub.f32 %v61, %v239
    %v259 = vsub.f32 %v62, %v243
    %v260 = vmul.f32 %v154, %v154
    %v261 = vmul.f32 %v155, %v155
    %v262 = vmul.f32 %v156, %v156
    %v263 = vmul.f32 %v157, %v157
    %v264 = vmul.f32 %v158, %v158
    %v265 = vmul.f32 %v159, %v159
    %v266 = vmul.f32 %v160, %v160
    %v267 = vmul.f32 %v161, %v161
    %v268 = vmul.f32 %v252, %v252
    %v269 = vmul.f32 %v253, %v253
    %v270 = vmul.f32 %v254, %v254
    %v271 = vmul.f32 %v255, %v255
    %v272 = vmul.f32 %v256, %v256
    %v273 = vmul.f32 %v257, %v257
    %v274 = vmul.f32 %v258, %v258
    %v275 = vmul.f32 %v259, %v259
    %v276 = vadd.f32 %v260, %v268
    %v277 = vadd.f32 %v261, %v269
    %v278 = vadd.f32 %v262, %v270
    %v279 = vadd.f32 %v263, %v271
    %v280 = vadd.f32 %v264, %v272
    %v281 = vadd.f32 %v265, %v273
    %v282 = vadd.f32 %v266, %v274
    %v283 = vadd.f32 %v267, %v275
    %v284 = vrsqrt.pop %v276
    %v285 = vmul.f32 %v276, %v284
    %vm286 = vcmp.eq.f32.partialorder %v276, inf
    %v287 = vsel %vm286, %v276, %v285
    %vm288 = vcmp.eq.f32.partialorder %v276, 0.0
    %v289 = vand.u32 %v276, 2147483648
    %v290 = vsel %vm288, %v289, %v287
    %v291 = vrsqrt.pop %v277
    %v292 = vmul.f32 %v277, %v291
    %vm293 = vcmp.eq.f32.partialorder %v277, inf
    %v294 = vsel %vm293, %v277, %v292
    %vm295 = vcmp.eq.f32.partialorder %v277, 0.0
    %v296 = vand.u32 %v277, 2147483648
    %v297 = vsel %vm295, %v296, %v294
    %v298 = vrsqrt.pop %v278
    %v299 = vmul.f32 %v278, %v298
    %vm300 = vcmp.eq.f32.partialorder %v278, inf
    %v301 = vsel %vm300, %v278, %v299
    %vm302 = vcmp.eq.f32.partialorder %v278, 0.0
    %v303 = vand.u32 %v278, 2147483648
    %v304 = vsel %vm302, %v303, %v301
    %v305 = vrsqrt.pop %v279
    %v306 = vmul.f32 %v279, %v305
    %vm307 = vcmp.eq.f32.partialorder %v279, inf
    %v308 = vsel %vm307, %v279, %v306
    %vm309 = vcmp.eq.f32.partialorder %v279, 0.0
    %v310 = vand.u32 %v279, 2147483648
    %v311 = vsel %vm309, %v310, %v308
    %v312 = vrsqrt.pop %v280
    %v313 = vmul.f32 %v280, %v312
    %vm314 = vcmp.eq.f32.partialorder %v280, inf
    %v315 = vsel %vm314, %v280, %v313
    %vm316 = vcmp.eq.f32.partialorder %v280, 0.0
    %v317 = vand.u32 %v280, 2147483648
    %v318 = vsel %vm316, %v317, %v315
    %v319 = vrsqrt.pop %v281
    %v320 = vmul.f32 %v281, %v319
    %vm321 = vcmp.eq.f32.partialorder %v281, inf
    %v322 = vsel %vm321, %v281, %v320
    %vm323 = vcmp.eq.f32.partialorder %v281, 0.0
    %v324 = vand.u32 %v281, 2147483648
    %v325 = vsel %vm323, %v324, %v322
    %v326 = vrsqrt.pop %v282
    %v327 = vmul.f32 %v282, %v326
    %vm328 = vcmp.eq.f32.partialorder %v282, inf
    %v329 = vsel %vm328, %v282, %v327
    %vm330 = vcmp.eq.f32.partialorder %v282, 0.0
    %v331 = vand.u32 %v282, 2147483648
    %v332 = vsel %vm330, %v331, %v329
    %v333 = vrsqrt.pop %v283
    %v334 = vmul.f32 %v283, %v333
    %vm335 = vcmp.eq.f32.partialorder %v283, inf
    %v336 = vsel %vm335, %v283, %v334
    %vm337 = vcmp.eq.f32.partialorder %v283, 0.0
    %v338 = vand.u32 %v283, 2147483648
    %v339 = vsel %vm337, %v338, %v336
    %vm340 = vcmask 60416
    %v341 = vsel %vm340, %v290, 0.0
    %342 = vadd.xlane.f32.xlu0 %v341
    %v343 = vpop.xlane.xlu0 %342
    %v344 = vsel %vm340, %v297, 0.0
    %345 = vadd.xlane.f32.xlu0 %v344
    %v346 = vpop.xlane.xlu0 %345
    %v347 = vsel %vm340, %v304, 0.0
    %348 = vadd.xlane.f32.xlu0 %v347
    %v349 = vpop.xlane.xlu0 %348
    %v350 = vsel %vm340, %v311, 0.0
    %351 = vadd.xlane.f32.xlu0 %v350
    %v352 = vpop.xlane.xlu0 %351
    %v353 = vsel %vm340, %v318, 0.0
    %354 = vadd.xlane.f32.xlu0 %v353
    %v355 = vpop.xlane.xlu0 %354
    %v356 = vsel %vm340, %v325, 0.0
    %357 = vadd.xlane.f32.xlu0 %v356
    %v358 = vpop.xlane.xlu0 %357
    %v359 = vsel %vm340, %v332, 0.0
    %360 = vadd.xlane.f32.xlu0 %v359
    %v361 = vpop.xlane.xlu0 %360
    %v362 = vsel %vm340, %v339, 0.0
    %363 = vadd.xlane.f32.xlu0 %v362
    %v364 = vpop.xlane.xlu0 %363
    %v365 = vmul.f32 %v343, 0.125
    %v366 = vmul.f32 %v346, 0.125
    %v367 = vmul.f32 %v349, 0.125
    %v368 = vmul.f32 %v352, 0.125
    %v369 = vmul.f32 %v355, 0.125
    %v370 = vmul.f32 %v358, 0.125
    %v371 = vmul.f32 %v361, 0.125
    %v372 = vmul.f32 %v364, 0.125
    %v381 = vlaneseq
    %v382 = vand.u32 %v381, 127
    %v383 = vlaneseq
    %v384 = vshrl.u32 %v383, 7
    %v385 = vsub.s32 %v382, %v384
    %v386 = vrot.slane %v365, %v385
    %v387 = vlaneseq
    %v388 = vshrl.u32 %v387, 7
    %v389 = vsub.s32 %v382, %v388
    %v390 = vrot.slane %v366, %v389
    %v391 = vlaneseq
    %v392 = vshrl.u32 %v391, 7
    %v393 = vsub.s32 %v382, %v392
    %v394 = vrot.slane %v367, %v393
    %v395 = vlaneseq
    %v396 = vshrl.u32 %v395, 7
    %v397 = vsub.s32 %v382, %v396
    %v398 = vrot.slane %v368, %v397
    %v399 = vlaneseq
    %v400 = vshrl.u32 %v399, 7
    %v401 = vsub.s32 %v382, %v400
    %v402 = vrot.slane %v369, %v401
    %v403 = vlaneseq
    %v404 = vshrl.u32 %v403, 7
    %v405 = vsub.s32 %v382, %v404
    %v406 = vrot.slane %v370, %v405
    %v407 = vlaneseq
    %v408 = vshrl.u32 %v407, 7
    %v409 = vsub.s32 %v382, %v408
    %v410 = vrot.slane %v371, %v409
    %v411 = vlaneseq
    %v412 = vshrl.u32 %v411, 7
    %v413 = vsub.s32 %v382, %v412
    %v414 = vrot.slane %v372, %v413
    %vm415 = vcmask 1041409
    %v416 = vsel %vm415, %v390, %v386
    %vm417 = vcmask 1042434
    %v418 = vsel %vm417, %v394, %v416
    %vm419 = vcmask 1043459
    %v420 = vsel %vm419, %v398, %v418
    %vm421 = vcmask 1044484
    %v422 = vsel %vm421, %v402, %v420
    %vm423 = vcmask 1045509
    %v424 = vsel %vm423, %v406, %v422
    %vm425 = vcmask 1046534
    %v426 = vsel %vm425, %v410, %v424
    %vm427 = vcmask 1047559
    %v428 = vsel %vm427, %v414, %v426
    %vm430 = vcmask 31744
    %v431 = vsel %vm430, %v428, inf
    %432 = vmin.xlane.f32.xlu0 %v431
    %v433 = vpop.xlane.xlu0 %432
    %v435 = vlaneseq
    %v436 = vshrl.u32 %v435, 7
    %v437 = vsub.s32 0, %v436
    %v438 = vrot.slane %v433, %v437
    %v439 = vlaneseq
    %v440 = vshrl.u32 %v439, 7
    %v441 = vsub.s32 1, %v440
    %v442 = vrot.slane %v433, %v441
    %v443 = vlaneseq
    %v444 = vshrl.u32 %v443, 7
    %v445 = vsub.s32 2, %v444
    %v446 = vrot.slane %v433, %v445
    %v447 = vlaneseq
    %v448 = vshrl.u32 %v447, 7
    %v449 = vsub.s32 3, %v448
    %v450 = vrot.slane %v433, %v449
    %v451 = vlaneseq
    %v452 = vshrl.u32 %v451, 7
    %v453 = vsub.s32 4, %v452
    %v454 = vrot.slane %v433, %v453
    %v455 = vlaneseq
    %v456 = vshrl.u32 %v455, 7
    %v457 = vsub.s32 5, %v456
    %v458 = vrot.slane %v433, %v457
    %v459 = vlaneseq
    %v460 = vshrl.u32 %v459, 7
    %v461 = vsub.s32 6, %v460
    %v462 = vrot.slane %v433, %v461
    %v463 = vlaneseq
    %v464 = vshrl.u32 %v463, 7
    %v465 = vsub.s32 7, %v464
    %v466 = vrot.slane %v433, %v465
    %vm475 = vcmp.eq.f32.partialorder %v365, %v438
    %vm476 = vcmp.eq.f32.partialorder %v366, %v442
    %vm477 = vcmp.eq.f32.partialorder %v367, %v446
    %vm478 = vcmp.eq.f32.partialorder %v368, %v450
    %vm479 = vcmp.eq.f32.partialorder %v369, %v454
    %vm480 = vcmp.eq.f32.partialorder %v370, %v458
    %vm481 = vcmp.eq.f32.partialorder %v371, %v462
    %vm482 = vcmp.eq.f32.partialorder %v372, %v466
    %484 = vbcast.lane.b32.xlu0 %v382, 256
    %v485 = vpop.permute.xlu0 %484
    %v486 = vsel %vm475, %v485, 4
    %v487 = vsel %vm476, %v485, 4
    %v488 = vsel %vm477, %v485, 4
    %v489 = vsel %vm478, %v485, 4
    %v490 = vsel %vm479, %v485, 4
    %v491 = vsel %vm480, %v485, 4
    %v492 = vsel %vm481, %v485, 4
    %v493 = vsel %vm482, %v485, 4
    %494 = vset.pattern.permute.xlu0 0
    %495 = vperm.xlu0 %494, %v486
    %v496 = vpop.permute.xlu0 %495
    %497 = vset.pattern.permute.xlu0 0
    %498 = vperm.xlu0 %497, %v487
    %v499 = vpop.permute.xlu0 %498
    %500 = vset.pattern.permute.xlu0 0
    %501 = vperm.xlu0 %500, %v488
    %v502 = vpop.permute.xlu0 %501
    %503 = vset.pattern.permute.xlu0 0
    %504 = vperm.xlu0 %503, %v489
    %v505 = vpop.permute.xlu0 %504
    %506 = vset.pattern.permute.xlu0 0
    %507 = vperm.xlu0 %506, %v490
    %v508 = vpop.permute.xlu0 %507
    %509 = vset.pattern.permute.xlu0 0
    %510 = vperm.xlu0 %509, %v491
    %v511 = vpop.permute.xlu0 %510
    %512 = vset.pattern.permute.xlu0 0
    %513 = vperm.xlu0 %512, %v492
    %v514 = vpop.permute.xlu0 %513
    %515 = vset.pattern.permute.xlu0 0
    %516 = vperm.xlu0 %515, %v493
    %v517 = vpop.permute.xlu0 %516
    %v518 = vlaneseq
    %v519 = vshrl.u32 %v518, 7
    %v520 = vsub.s32 %v382, %v519
    %v521 = vrot.slane %v496, %v520
    %v522 = vlaneseq
    %v523 = vshrl.u32 %v522, 7
    %v524 = vsub.s32 %v382, %v523
    %v525 = vrot.slane %v499, %v524
    %v526 = vlaneseq
    %v527 = vshrl.u32 %v526, 7
    %v528 = vsub.s32 %v382, %v527
    %v529 = vrot.slane %v502, %v528
    %v530 = vlaneseq
    %v531 = vshrl.u32 %v530, 7
    %v532 = vsub.s32 %v382, %v531
    %v533 = vrot.slane %v505, %v532
    %v534 = vlaneseq
    %v535 = vshrl.u32 %v534, 7
    %v536 = vsub.s32 %v382, %v535
    %v537 = vrot.slane %v508, %v536
    %v538 = vlaneseq
    %v539 = vshrl.u32 %v538, 7
    %v540 = vsub.s32 %v382, %v539
    %v541 = vrot.slane %v511, %v540
    %v542 = vlaneseq
    %v543 = vshrl.u32 %v542, 7
    %v544 = vsub.s32 %v382, %v543
    %v545 = vrot.slane %v514, %v544
    %v546 = vlaneseq
    %v547 = vshrl.u32 %v546, 7
    %v548 = vsub.s32 %v382, %v547
    %v549 = vrot.slane %v517, %v548
    %v550 = vsel %vm415, %v525, %v521
    %v551 = vsel %vm417, %v529, %v550
    %v552 = vsel %vm419, %v533, %v551
    %v553 = vsel %vm421, %v537, %v552
    %v554 = vsel %vm423, %v541, %v553
    %v555 = vsel %vm425, %v545, %v554
    %v556 = vsel %vm427, %v549, %v555
    %v557 = vsel %vm430, %v556, 2147483647
    %v558 = vand.u32 %v557, 65535
    %v559 = vshra.s32 %v557, 16
    %v560 = vcvt.s32.f32 %v558
    %v561 = vcvt.s32.f32 %v559
    %562 = vmin.xlane.f32.xlu0 %v561
    %v563 = vpop.xlane.xlu0 %562
    %vm564 = vcmp.eq.f32.partialorder %v561, %v563
    %v565 = vsel %vm564, %v560, inf
    %566 = vmin.xlane.f32.xlu0 %v565
    %v567 = vpop.xlane.xlu0 %566
    %v568 = vcvt.f32.s32 %v567
    %v569 = vcvt.f32.s32 %v563
    %v570 = vshll.u32 %v569, 16
    %v571 = vadd.s32 %v570, %v568
    %vm572 = vcmp.eq.s32.totalorder %v382, %v571
    %v573 = vsel %vm572, 1, 0
    %v574 = vcvt.s32.f32 %v573
    %v575 = vmul.f32 %v63, %v574
    %v576 = vsel %vm430, %v575, 0.0
    %577 = vadd.xlane.f32.xlu0 %v576
    %v578 = vpop.xlane.xlu0 %577
    %v579 = vsel %vm430, %v63, -inf
    %580 = vmax.xlane.f32.xlu0 %v579
    %v581 = vpop.xlane.xlu0 %580
    %v582 = vsub.f32 %v63, %v581
    %v583 = vmul.f32 %v582, 1.442695
    %v584 = vpow.pop %v583
    %v585 = vsel %vm430, %v584, 0.0
    %586 = vadd.xlane.f32.xlu0 %v585
    %v587 = vpop.xlane.xlu0 %586
    %v588 = vlog2.pop %v587
    %v589 = vmul.f32 %v588, 0.6931472
    %v590 = vadd.f32 %v589, %v581
    %v591 = vsub.f32 %v590, %v578
    %v592 = vadd.f32 %v433, %v591
    %s593 = smul.u32 0, 8
    %v594 = vlaneseq
    %v595 = vshrl.u32 %v594, 7
    %v596 = vstv %s593
    %v597 = vadd.s32 %v596, %v595
    %vm598 = vcmp.lt.s32.totalorder %v597, 2
    %v599 = vsel %vm598, %v592, 0.0
    %vm600 = vcmask 7168
    %v601 = vsel %vm600, %v599, 0.0
    %602 = vadd.xlane.f32.xlu0 %v601
    %v603 = vpop.xlane.xlu0 %602
    %v604 = vrot.slane %v603, 4
    %v605 = vadd.f32 %v603, %v604
    %v606 = vrot.slane %v605, 2
    %v607 = vadd.f32 %v605, %v606
    %v608 = vrot.slane %v607, 1
    %v609 = vadd.f32 %v607, %v608
    %s610 = vtos %v609
    %v611 = vstv %s610
    %612 = vst [vmem:[#allocation7] sm:$0xff] %v611
    // Predicated region
    $region22: #{tpu_custom_call.1} parent=1 // pred_check
      _
    $region23: #{tpu_custom_call.1} parent=1 // pred_check_branch
      %614 = sbr.rel (0) target = $region25
    $region24: #{tpu_custom_call.1} parent=1 // pred_region
      %s616 = ssub.s32 128, 128
      %617 = vsyncadd [#allocation4], %s616
      %s619 = sshll.u32 [#allocation7], 4
      %s620 = int_to_ptr.vmem [resolvable:$true] %s619
      %622 = dma.vmem_to_hbm [thread:$0]  %s620, 128, %s3, [#allocation4]
    $region25: #{tpu_custom_call.1} parent=1 // pred_fallthru
      _
    // Predicated region
    $region26: #{tpu_custom_call.1} parent=1 // pred_check
      _
    $region27: #{tpu_custom_call.1} parent=1 // pred_check_branch
      %624 = sbr.rel (0) target = $region29
    $region28: #{tpu_custom_call.1} parent=1 // pred_region
      %625 = dma.done [#allocation4], 128
    $region29: #{tpu_custom_call.1} parent=1 // pred_fallthru
      _
    %626 = vsyncpa [#allocation3], 1
    %627 = vsyncpa [#allocation6], 1
    %628 = vsyncpa [#allocation4], 1

</llo_original>
